<compile_context>
chip_gen: v7x
topology: tpu7x:2x2x1
jax: 0.10.0
libtpu: 0.0.40
codegen_flags: <defaults>
</compile_context>

<pallas_src>
import jax
import jax.numpy as jnp
from jax.experimental import pallas as pl
from jax.experimental.pallas import tpu as pltpu


# ---------------------------------------------------------------------------
# Primary path: HBM -> HBM DMA clone (no VMEM round trip, no reshape).
# ---------------------------------------------------------------------------

_MAX_DMA_CHUNKS = 8
_MIN_DMA_CHUNK_BYTES = 1 << 20  # do not split below ~1 MiB per DMA


def _dma_row_splits(rows: int, max_chunks: int):
    """Static (start, size) chunks along the leading axis."""
    if max_chunks <= 1 or rows < 2:
        return ((0, rows),)
    per = -(-rows // max_chunks)  # ceil division
    splits, start = [], 0
    while start < rows:
        size = min(per, rows - start)
        splits.append((start, size))
        start += size
    return tuple(splits)


def _dma_clone(x: jnp.ndarray) -> jnp.ndarray:
    """Out-of-place identity (torch .clone()) as a direct HBM->HBM DMA."""
    itemsize = jnp.dtype(x.dtype).itemsize
    nbytes = int(x.size) * itemsize

    # Keep the original shape (no layout-changing reshape); only promote 0-d.
    work = x if x.ndim >= 1 else x.reshape(1, 1)
    lead = int(work.shape[0])

    # Chunk big arrays along the (physically contiguous) leading axis so
    # multiple DMA engines can run concurrently.
    splits = None
    if lead >= 2 and nbytes >= 2 * _MIN_DMA_CHUNK_BYTES:
        max_chunks = int(min(_MAX_DMA_CHUNKS, nbytes // _MIN_DMA_CHUNK_BYTES, lead))
        cand = _dma_row_splits(lead, max_chunks)
        if len(cand) > 1:
            splits = cand
    n_sems = len(splits) if splits is not None else 1

    def kernel(x_ref, o_ref, sem):
        if splits is None:
            cp = pltpu.make_async_copy(x_ref, o_ref, sem.at[0])
            cp.start()
            cp.wait()
        else:
            # Start every chunk first (parallel DMA engines), then wait all.
            for i, (r0, sz) in enumerate(splits):
                pltpu.make_async_copy(
                    x_ref.at[r0:r0 + sz], o_ref.at[r0:r0 + sz], sem.at[i]
                ).start()
            for i, (r0, sz) in enumerate(splits):
                pltpu.make_async_copy(
                    x_ref.at[r0:r0 + sz], o_ref.at[r0:r0 + sz], sem.at[i]
                ).wait()

    y = pl.pallas_call(
        kernel,
        out_shape=jax.ShapeDtypeStruct(work.shape, work.dtype),
        in_specs=[pl.BlockSpec(memory_space=pl.ANY)],
        out_specs=pl.BlockSpec(memory_space=pl.ANY),
        scratch_shapes=[pltpu.SemaphoreType.DMA((n_sems,))],
        cost_estimate=pl.CostEstimate(
            flops=0, transcendentals=0, bytes_accessed=int(2 * nbytes)
        ),
    )(work)
    return y if y.shape == x.shape else y.reshape(x.shape)


# ---------------------------------------------------------------------------
# Fallback path: tiled VMEM identity copy (proven on TPU).
# ---------------------------------------------------------------------------

def _identity_copy_kernel(x_ref, o_ref):
    # Pure elementwise identity: stream the tile through VMEM unchanged.
    o_ref[...] = x_ref[...]


_LANE_CANDIDATES = (4096, 2048, 1024, 512, 256, 128)


def _round_up(x: int, m: int) -> int:
    return ((x + m - 1) // m) * m


def _sublane_multiple(itemsize: int) -> int:
    # f32 -> 8 rows/vreg, bf16 -> 16, int8/fp8 -> 32 (sublane packing).
    return {4: 8, 2: 16, 1: 32}.get(int(itemsize), 8)


def _vmem_capacity_bytes() -> int:
    try:
        return int(pltpu.get_tpu_info().vmem_capacity_bytes)
    except Exception:
        return 64 << 20  # conservative: v7x per-TensorCore VMEM


def _choose_tile_rows(M: int, N: int, itemsize: int):
    """Pick a sublane-aligned row-tile sized in bytes, plus a VMEM limit."""
    sub = _sublane_multiple(itemsize)
    vmem_limit = min(_vmem_capacity_bytes() // 2, 64 << 20)
    total_bytes = M * N * itemsize
    if total_bytes <= (2 << 20):
        # Per-grid-step overhead would dominate; one full block fits easily.
        return M, vmem_limit
    # in + out, double-buffered => ~4 live tile buffers; keep ~2x headroom.
    target_tile_bytes = max(1 << 20, min(vmem_limit // 8, 8 << 20))
    budget_rows = max(sub, (target_tile_bytes // max(N * itemsize, 1)) // sub * sub)
    # Prefer >= ~8 blocks so a v7x megacore grid has work for both cores.
    balanced_rows = _round_up(-(-M // 8), sub)
    tile_rows = max(sub, min(budget_rows, balanced_rows))
    if tile_rows >= M:
        tile_rows = M  # single full block (always a legal block shape)
    return tile_rows, vmem_limit


def _pallas_identity_copy_2d(x2d: jnp.ndarray) -> jnp.ndarray:
    """Tiled identity copy of a 2D array [M, N] via pallas_call."""
    M, N = x2d.shape
    itemsize = jnp.dtype(x2d.dtype).itemsize
    tile_rows, vmem_limit = _choose_tile_rows(M, N, itemsize)
    grid = (pl.cdiv(M, tile_rows),)
    return pl.pallas_call(
        _identity_copy_kernel,
        out_shape=jax.ShapeDtypeStruct((M, N), x2d.dtype),
        grid=grid,
        in_specs=[pl.BlockSpec((tile_rows, N), lambda i: (i, 0))],
        out_specs=pl.BlockSpec((tile_rows, N), lambda i: (i, 0)),
        compiler_params=pltpu.CompilerParams(
            dimension_semantics=("parallel",),
            vmem_limit_bytes=int(vmem_limit),
        ),
        cost_estimate=pl.CostEstimate(
            flops=0,
            transcendentals=0,
            bytes_accessed=int(2 * M * N * itemsize),
        ),
    )(x2d)


def _tiled_clone(x: jnp.ndarray) -> jnp.ndarray:
    """Out-of-place identity through the tiled Pallas VMEM copy kernel."""
    if x.size == 0:
        return x
    orig_shape = x.shape
    total = int(x.size)
    # Lane-dense view: big 128-aligned lane axis -> unmasked full-width stores.
    lanes = None
    for cand in _LANE_CANDIDATES:
        if total % cand == 0:
            lanes = cand
            break
    if lanes is None:
        # Fall back to the natural trailing axis (ragged grid handles rows).
        lanes = int(orig_shape[-1]) if x.ndim >= 1 else 1
        lanes = max(lanes, 1)
    x2d = x.reshape(-1, lanes)
    y2d = _pallas_identity_copy_2d(x2d)
    return y2d.reshape(orig_shape)


# ---------------------------------------------------------------------------
# Dispatcher: DMA clone first, tiled VMEM clone as a safety net.
# ---------------------------------------------------------------------------

_DMA_PATH_OK = True  # flipped to False once if the DMA clone fails to lower


def _pallas_clone(x: jnp.ndarray) -> jnp.ndarray:
    global _DMA_PATH_OK
    if x.size == 0:
        return x
    if _DMA_PATH_OK:
        try:
            return _dma_clone(x)
        except Exception:
            # TODO(synk): narrow once the exact unsupported case is known;
            # until then fall back to the proven tiled VMEM copy kernel.
            _DMA_PATH_OK = False
    return _tiled_clone(x)


# ---------------------------------------------------------------------------
# BasePreprocessor port (config handling is plain Python, no tensors).
# ---------------------------------------------------------------------------

class BasePreprocessor:
    """JAX/Pallas port of anemoi BasePreprocessor.

    transform / inverse_transform are identity maps; the `in_place=False`
    branch (torch `.clone()`) is realized as a Pallas HBM->HBM DMA copy.
    """

    def __init__(self, config=None, statistics=None, data_indices=None):
        config = config if config is not None else {}
        self.default, self.method_config = self._process_config(config)
        self.methods = self._invert_key_value_list(self.method_config)
        self.data_indices = data_indices

    def _process_config(self, config):
        default = config.get("default", "none")
        method_config = {
            k: v
            for k, v in config.items()
            if k != "default" and v is not None and v != "none"
        }
        return default, method_config

    def _invert_key_value_list(self, method_config):
        return {
            variable: method
            for method, variables in method_config.items()
            if not isinstance(variables, str)
            for variable in variables
        }

    # ---- tensor path -------------------------------------------------------

    def _identity(self, x, in_place: bool):
        if in_place:
            # torch: return x unchanged. JAX arrays are immutable, so returning
            # the same array preserves semantics exactly.
            return x
        return _pallas_clone(x)

    def transform(self, x, in_place: bool = True):
        return self._identity(x, in_place)

    def inverse_transform(self, x, in_place: bool = True):
        return self._identity(x, in_place)

    def forward(self, x, in_place: bool = True, inverse: bool = False):
        if inverse:
            return self.inverse_transform(x, in_place=in_place)
        return self.transform(x, in_place=in_place)

    __call__ = forward


if __name__ == "__main__":
    key = jax.random.PRNGKey(0)
    # anemoi-style (batch, time, grid, vars)
    x = jax.random.normal(key, (2, 4, 16, 16), dtype=jnp.float32)

    pre = BasePreprocessor(config={"default": "none", "mean-std": ["q", "t"]})

    # forward, out-of-place (single HBM->HBM DMA clone)
    y = jax.block_until_ready(pre.forward(x, in_place=False, inverse=False))
    # inverse forward, out-of-place (also identity)
    z = jax.block_until_ready(pre.forward(y, in_place=False, inverse=True))
    # in-place path returns the same array (identity, no copy)
    w = pre.forward(x, in_place=True)

    assert y.shape == x.shape and y.dtype == x.dtype
    assert bool(jnp.all(y == x))
    assert bool(jnp.all(z == x))
    assert w is x
    assert pre.methods == {"q": "mean-std", "t": "mean-std"}

    # Non-128-divisible, oddly shaped input -> full-ref DMA, no reshape.
    x2 = jax.random.normal(jax.random.PRNGKey(1), (3, 5, 7, 11), dtype=jnp.float32)
    y2 = jax.block_until_ready(pre.forward(x2, in_place=False))
    assert bool(jnp.all(y2 == x2))

    # Sub-32-bit dtype path.
    x3 = x.astype(jnp.bfloat16)
    y3 = jax.block_until_ready(pre.forward(x3, in_place=False))
    assert y3.dtype == jnp.bfloat16 and bool(jnp.all(y3 == x3))

    # Larger array (4 MiB) -> exercises the chunked multi-DMA path.
    x4 = jax.random.normal(jax.random.PRNGKey(2), (1024, 1024), dtype=jnp.float32)
    y4 = jax.block_until_ready(pre.forward(x4, in_place=False))
    assert bool(jnp.all(y4 == x4))

    # Also validate the tiled-VMEM fallback kernel directly.
    yt = jax.block_until_ready(_tiled_clone(x))
    assert bool(jnp.all(yt == x))

    print("KERNEL_OK")
</pallas_src>

<mosaic_0001>
module attributes {stable_mosaic.version = 11 : i64} {
  func.func @kernel(%arg0: memref<2x4x16x16xf32, #tpu.memory_space<any>>, %arg1: memref<2x4x16x16xf32, #tpu.memory_space<any>>, %arg2: memref<1x!tpu.dma_semaphore, #tpu.memory_space<semaphore_mem>>) attributes {dimension_semantics = [], scalar_prefetch = 0 : i64, scratch_operands = 1 : i64, tpu.core_type = #tpu.core_type<tc>} {
    %c0_i32 = arith.constant 0 : i32
    %0 = tpu.memref_slice %arg2[%c0_i32] : memref<1x!tpu.dma_semaphore, #tpu.memory_space<semaphore_mem>> -> memref<1x!tpu.dma_semaphore, #tpu.memory_space<semaphore_mem>>
    %1 = tpu.memref_squeeze %0 : memref<1x!tpu.dma_semaphore, #tpu.memory_space<semaphore_mem>> -> memref<!tpu.dma_semaphore, #tpu.memory_space<semaphore_mem>>
    tpu.enqueue_dma source(%arg0 : memref<2x4x16x16xf32, #tpu.memory_space<any>>) target(%arg1 : memref<2x4x16x16xf32, #tpu.memory_space<any>>) target_semaphore(%1 : memref<!tpu.dma_semaphore, #tpu.memory_space<semaphore_mem>>)
    %c0_i32_0 = arith.constant 0 : i32
    %2 = tpu.memref_slice %arg2[%c0_i32_0] : memref<1x!tpu.dma_semaphore, #tpu.memory_space<semaphore_mem>> -> memref<1x!tpu.dma_semaphore, #tpu.memory_space<semaphore_mem>>
    %3 = tpu.memref_squeeze %2 : memref<1x!tpu.dma_semaphore, #tpu.memory_space<semaphore_mem>> -> memref<!tpu.dma_semaphore, #tpu.memory_space<semaphore_mem>>
    tpu.wait_dma2 semaphore(%3 : memref<!tpu.dma_semaphore, #tpu.memory_space<semaphore_mem>>) src(%arg0 : memref<2x4x16x16xf32, #tpu.memory_space<any>>) dst(%arg1 : memref<2x4x16x16xf32, #tpu.memory_space<any>>)
    return
  }
}

module attributes {stable_mosaic.version = 11 : i64} {
  func.func @_identity_copy_kernel(%arg0: i32, %arg1: memref<1x2048xf32, #tpu.memory_space<vmem>>, %arg2: memref<1x2048xf32, #tpu.memory_space<vmem>>) attributes {dimension_semantics = [#tpu.dimension_semantics<parallel>], iteration_bounds = array<i64: 1>, scalar_prefetch = 0 : i64, scratch_operands = 0 : i64, tpu.core_type = #tpu.core_type<tc>, window_params = [{transform_indices = @transform_0, window_bounds = array<i64: 1, 2048>}, {transform_indices = @transform_1, window_bounds = array<i64: 1, 2048>}]} {
    %c0 = arith.constant 0 : index
    %c0_0 = arith.constant 0 : index
    %0 = vector.load %arg1[%c0, %c0_0] : memref<1x2048xf32, #tpu.memory_space<vmem>>, vector<1x2048xf32>
    %c0_1 = arith.constant 0 : index
    %c0_2 = arith.constant 0 : index
    %1 = vector.load %arg2[%c0_1, %c0_2] : memref<1x2048xf32, #tpu.memory_space<vmem>>, vector<1x2048xf32>
    tpu.vector_store %arg2[%c0_1, %c0_2], %0 {strides = array<i32>} : memref<1x2048xf32, #tpu.memory_space<vmem>>, vector<1x2048xf32>,
    return
  }
  func.func @transform_0(%arg0: i32) -> (i32, i32) {
    %c0_i32 = arith.constant 0 : i32
    %c0_i32_0 = arith.constant 0 : i32
    return %arg0, %c0_i32 : i32, i32
  }
  func.func @transform_1(%arg0: i32) -> (i32, i32) {
    %c0_i32 = arith.constant 0 : i32
    %c0_i32_0 = arith.constant 0 : i32
    return %arg0, %c0_i32 : i32, i32
  }
}

</mosaic_0001>

<llo_original>
// kernel: tpu_custom_call.1
$region0: #{tpu_custom_call.1}
  #allocation0 [shape = 'u32[]', space=smem, size = 0x4, offset = 0x4, fixed_abs, tag = 'smem constant byte address 0x4 - core index']
  #allocation1 [shape = 'u32[144,128]{1,0:T(1,128)}', space=vmem, size = 0x12000, scoped, tag = 'internal scratch']
  #allocation2 [shape = 's32[1]{0}', space=sflag, size = 0x4, scoped, tag = 'scratch operand']
  #allocation3 [shape = 's32[]', space=sflag, size = 0x4, offset = 0, fixed_abs, tag = 'sflag constant byte address 0x0 - dummy sync flag']
  #allocation4 [shape = 'u32[0]{0}', space=smem, size = 0, offset = 0, fixed_abs, tag = 'smem constant byte address 0x0 - null']
  %s0 = inlined_call_operand.hbm [shape: f32[2,4,16,16], index: 0, kind: input, shape index: {}]
  %s1 = inlined_call_operand.hbm [shape: f32[2,4,16,16], index: 1, kind: output, shape index: {}]
  %s2 = sld [smem:[#allocation0]]
  $region2: #{tpu_custom_call.1} parent=0
    _
  %s4 = ssub.s32 1, %s2
  %s5 = scalar_select 0, %s4, %s2
  %s7 = sshll.u32 1, 14
  %s8 = sxor.u32 4294967295, %s7
  %s11 = sshll.u32 3, 24
  %s12 = sxor.u32 4294967295, %s11
  %s13 = sand.u32 0, %s12
  %s15 = sor.u32 %s13, 0
  %18 = dma.general %s0, 2048, %s1, [#allocation2], [#allocation3], [#allocation4], %s15, 0
  %s19 = smul.u32 2, 4
  %s20 = smul.u32 %s19, 16
  %s21 = smul.u32 %s20, 1
  %s22 = sshll.u32 %s21, 4
  %23 = dma.done [#allocation2], %s22
  %24 = vsyncmov [#allocation2]
  %s25 = vpop.sfrf %24
  %p26 = scmp.eq.s32.totalorder %s25, 0
  %p27 = pneg %p26
  %29 = shalt.err (%p27)

// kernel: tpu_custom_call.1
$region0: #{tpu_custom_call.1}
  #allocation0 [shape = 'u32[]', space=smem, size = 0x4, offset = 0x4, fixed_abs, tag = 'smem constant byte address 0x4 - core index']
  #allocation1 [shape = 'u32[144,128]{1,0:T(1,128)}', space=vmem, size = 0x12000, scoped, tag = 'internal scratch']
  %s0 = inlined_call_operand.hbm [shape: f32[1,2048], index: 0, kind: input, shape index: {}]
  %s1 = inlined_call_operand.hbm [shape: f32[1,2048], index: 1, kind: output, shape index: {}]
  %s2 = sld [smem:[#allocation0]]
  $region18: #{tpu_custom_call.1} parent=0
    _
  %s4 = ssub.s32 1, %s2
  %s5 = scalar_select 0, %s4, %s2
  $region1: #{tpu_custom_call.1} parent=0
    #allocation2 [shape = 'u8[8192]{0}', space=vmem, size = 0x2000, scoped, tag = 'input window, operand 0, single buffered']
    #allocation3 [shape = 's32[1]{0}', space=sflag, size = 0x4, scoped, tag = 'scoped memory for tpu_custom_call.1']
    #allocation4 [shape = 's32[1]{0}', space=sflag, size = 0x4, scoped, tag = 'scoped memory for tpu_custom_call.1']
    #allocation5 [shape = 'u8[8192]{0}', space=vmem, size = 0x2000, scoped, tag = 'output window, operand 0, single buffered']
    %6 = vsyncpa [#allocation3], 0
    %7 = vsyncpa [#allocation4], 0
    // Predicated region
    $region2: #{tpu_custom_call.1} parent=1 // pred_check
      _
    $region3: #{tpu_custom_call.1} parent=1 // pred_check_branch
      %9 = sbr.rel (0) target = $region5
    $region4: #{tpu_custom_call.1} parent=1 // pred_region
      %s11 = ssub.s32 256, 256
      %12 = vsyncadd [#allocation3], %s11
      %s14 = sshll.u32 [#allocation2], 4
      %s15 = int_to_ptr.vmem [resolvable:$true] %s14
      %17 = dma.hbm_to_vmem [thread:$0]  %s0, 256, %s15, [#allocation3]
    $region5: #{tpu_custom_call.1} parent=1 // pred_fallthru
      _
    // Predicated region
    $region6: #{tpu_custom_call.1} parent=1 // pred_check
      _
    $region7: #{tpu_custom_call.1} parent=1 // pred_check_branch
      %19 = sbr.rel (0) target = $region9
    $region8: #{tpu_custom_call.1} parent=1 // pred_region
      %20 = dma.done [#allocation3], 256
    $region9: #{tpu_custom_call.1} parent=1 // pred_fallthru
      _
    %v21 = vld [vmem:[#allocation2] sm:$0xff]
    %v22 = vld [vmem:[#allocation2 + $0x8] sm:$0xff]
    %23 = vst [vmem:[#allocation5] sm:$0xff] %v21
    %24 = vst [vmem:[#allocation5 + $0x8] sm:$0xff] %v22
    // Predicated region
    $region10: #{tpu_custom_call.1} parent=1 // pred_check
      _
    $region11: #{tpu_custom_call.1} parent=1 // pred_check_branch
      %26 = sbr.rel (0) target = $region13
    $region12: #{tpu_custom_call.1} parent=1 // pred_region
      %s28 = ssub.s32 256, 256
      %29 = vsyncadd [#allocation4], %s28
      %s31 = sshll.u32 [#allocation5], 4
      %s32 = int_to_ptr.vmem [resolvable:$true] %s31
      %34 = dma.vmem_to_hbm [thread:$0]  %s32, 256, %s1, [#allocation4]
    $region13: #{tpu_custom_call.1} parent=1 // pred_fallthru
      _
    // Predicated region
    $region14: #{tpu_custom_call.1} parent=1 // pred_check
      _
    $region15: #{tpu_custom_call.1} parent=1 // pred_check_branch
      %36 = sbr.rel (0) target = $region17
    $region16: #{tpu_custom_call.1} parent=1 // pred_region
      %37 = dma.done [#allocation4], 256
    $region17: #{tpu_custom_call.1} parent=1 // pred_fallthru
      _
    %38 = vsyncpa [#allocation3], 1
    %39 = vsyncpa [#allocation4], 1

</llo_original>
